<compile_context>
chip_gen: v5e
topology: v5e:2x2
jax: 0.10.0
libtpu: 0.0.40
codegen_flags: <defaults>
</compile_context>

<pallas_src>
import jax
import jax.numpy as jnp
from jax.experimental import pallas as pl
from jax.experimental.pallas import tpu as pltpu

INPUT_SIZE = 784
HIDDEN_SIZE = 100
NUM_CLASSES = 10
HIDDEN_PAD = 128           # hidden dim padded to one full lane width
DEFAULT_TILE_B = 2048      # rows per grid step; sweep 1024-4096 on v5e/v6e


def _round_up(n, m):
    return ((n + m - 1) // m) * m


def mlp_kernel(x_ref, w1_ref, b1_ref, w2_ref, b2_ref, o_ref):
    # l1: Linear(784 -> 128-padded hidden). bf16 MXU inputs, f32 accumulation.
    x = x_ref[...]
    if x.dtype != jnp.bfloat16:
        x = x.astype(jnp.bfloat16)
    h = jnp.dot(x, w1_ref[...], preferred_element_type=jnp.float32)
    h = jnp.maximum(h + b1_ref[...], 0.0)              # bias + ReLU in f32
    # l2: Linear(hidden -> 10). Output stays narrow (10); masked stores are
    # hidden under the x DMA, so no output padding.
    out = jnp.dot(h.astype(jnp.bfloat16), w2_ref[...],
                  preferred_element_type=jnp.float32)
    o_ref[...] = out + b2_ref[...]


def neural_net_forward(x, w1, b1, w2, b2, *, tile_b=DEFAULT_TILE_B):
    """x: (B, 784) bf16 (preferred) or f32. w1: (784, 128) bf16,
    b1: (1, 128) f32, w2: (128, 10) bf16, b2: (1, 10) f32.
    Returns (B, 10) f32 logits."""
    B = x.shape[0]
    # Shrink the tile for small batches (keep sublane-of-8 alignment), then pad
    # the batch up to a whole number of tiles (extra rows sliced off at the end).
    tile_b = max(8, min(tile_b, _round_up(B, 8)))
    b_pad = _round_up(B, tile_b)
    if b_pad != B:
        x = jnp.pad(x, ((0, b_pad - B), (0, 0)))
    grid = (pl.cdiv(b_pad, tile_b),)

    # Advisory cost estimate for XLA scheduling.
    flops = 2 * b_pad * INPUT_SIZE * HIDDEN_PAD + 2 * b_pad * HIDDEN_PAD * NUM_CLASSES
    bytes_accessed = (
        x.size * x.dtype.itemsize
        + w1.size * w1.dtype.itemsize + b1.size * b1.dtype.itemsize
        + w2.size * w2.dtype.itemsize + b2.size * b2.dtype.itemsize
        + b_pad * NUM_CLASSES * 4
    )

    # VMEM budget: double-buffered x + out streams, resident weights, and the
    # f32 hidden temporary. Clamp to <=48 MB so v7x (64 MiB/TC) keeps headroom.
    vmem_est = (
        2 * tile_b * INPUT_SIZE * x.dtype.itemsize       # x double buffer
        + 2 * tile_b * NUM_CLASSES * 4                   # out double buffer
        + w1.size * w1.dtype.itemsize + b1.size * 4
        + w2.size * w2.dtype.itemsize + b2.size * 4
        + 2 * tile_b * HIDDEN_PAD * 4                    # hidden temp + slack
    )
    vmem_limit = min(max(32 * 1024 * 1024, int(vmem_est * 1.3)), 48 * 1024 * 1024)

    out = pl.pallas_call(
        mlp_kernel,
        out_shape=jax.ShapeDtypeStruct((b_pad, NUM_CLASSES), jnp.float32),
        grid_spec=pl.GridSpec(
            grid=grid,
            in_specs=[
                pl.BlockSpec((tile_b, INPUT_SIZE), lambda i: (i, 0)),       # x streams
                pl.BlockSpec((INPUT_SIZE, HIDDEN_PAD), lambda i: (0, 0)),   # w1 resident
                pl.BlockSpec((1, HIDDEN_PAD), lambda i: (0, 0)),            # b1 resident
                pl.BlockSpec((HIDDEN_PAD, NUM_CLASSES), lambda i: (0, 0)),  # w2 resident
                pl.BlockSpec((1, NUM_CLASSES), lambda i: (0, 0)),           # b2 resident
            ],
            out_specs=pl.BlockSpec((tile_b, NUM_CLASSES), lambda i: (i, 0)),
        ),
        compiler_params=pltpu.CompilerParams(
            dimension_semantics=("parallel",),   # independent batch tiles
            vmem_limit_bytes=vmem_limit,
        ),
        cost_estimate=pl.CostEstimate(
            flops=flops, transcendentals=0, bytes_accessed=bytes_accessed),
    )(x, w1, b1, w2, b2)
    return out[:B]


def init_params(key):
    """PyTorch nn.Linear default init: U[-1/sqrt(fan_in), 1/sqrt(fan_in)]."""
    k1, k2, k3, k4 = jax.random.split(key, 4)
    bound1 = 1.0 / (INPUT_SIZE ** 0.5)
    bound2 = 1.0 / (HIDDEN_SIZE ** 0.5)
    # Stored already transposed vs. PyTorch's (out_features, in_features).
    w1 = jax.random.uniform(k1, (INPUT_SIZE, HIDDEN_SIZE), jnp.float32, -bound1, bound1)
    b1 = jax.random.uniform(k2, (1, HIDDEN_SIZE), jnp.float32, -bound1, bound1)
    w2 = jax.random.uniform(k3, (HIDDEN_SIZE, NUM_CLASSES), jnp.float32, -bound2, bound2)
    b2 = jax.random.uniform(k4, (1, NUM_CLASSES), jnp.float32, -bound2, bound2)
    return w1, b1, w2, b2


def pack_params(w1, b1, w2, b2):
    """Pad hidden 100 -> 128 (zeros) and cast matmul weights to bf16 for the kernel."""
    w1p = jnp.zeros((INPUT_SIZE, HIDDEN_PAD), jnp.float32).at[:, :HIDDEN_SIZE].set(w1)
    b1p = jnp.zeros((1, HIDDEN_PAD), jnp.float32).at[:, :HIDDEN_SIZE].set(b1)
    w2p = jnp.zeros((HIDDEN_PAD, NUM_CLASSES), jnp.float32).at[:HIDDEN_SIZE, :].set(w2)
    # Padded hidden lanes: relu(0 + 0) = 0 and zero w2 rows => contribute nothing.
    return w1p.astype(jnp.bfloat16), b1p, w2p.astype(jnp.bfloat16), b2


if __name__ == "__main__":
    key = jax.random.PRNGKey(0)
    k_params, k_x1, k_x2 = jax.random.split(key, 3)

    w1, b1, w2, b2 = init_params(k_params)
    w1k, b1k, w2k, b2k = pack_params(w1, b1, w2, b2)

    def ref_bf16(xv):  # same bf16-input / f32-accumulate math as the kernel
        h = jnp.dot(xv.astype(jnp.bfloat16), w1k,
                    preferred_element_type=jnp.float32) + b1k
        h = jnp.maximum(h, 0.0)
        return jnp.dot(h.astype(jnp.bfloat16), w2k,
                       preferred_element_type=jnp.float32) + b2k

    def ref_f32(xv):   # original full-precision PyTorch-equivalent forward
        return jnp.maximum(xv.astype(jnp.float32) @ w1 + b1, 0.0) @ w2 + b2

    # Small spec-sized run; x supplied in bf16 (preferred streaming dtype).
    B = 8
    x_f32 = jax.random.normal(k_x1, (B, INPUT_SIZE), jnp.float32)
    x = x_f32.astype(jnp.bfloat16)
    logits = jax.block_until_ready(neural_net_forward(x, w1k, b1k, w2k, b2k))
    assert logits.shape == (B, NUM_CLASSES)
    assert jnp.allclose(logits, ref_bf16(x), atol=2e-3, rtol=2e-3)
    assert float(jnp.max(jnp.abs(logits - ref_f32(x_f32)))) < 0.15  # bf16 vs f32 sanity

    # Multi-tile batch not divisible by the tile: exercises grid + padding path,
    # with f32 x to exercise the in-kernel cast path as well.
    B2 = 300
    x2 = jax.random.normal(k_x2, (B2, INPUT_SIZE), jnp.float32)
    logits2 = jax.block_until_ready(
        neural_net_forward(x2, w1k, b1k, w2k, b2k, tile_b=128))
    assert logits2.shape == (B2, NUM_CLASSES)
    assert jnp.allclose(logits2, ref_bf16(x2), atol=2e-3, rtol=2e-3)

    print("KERNEL_OK")
</pallas_src>

<mosaic_0001>
module attributes {stable_mosaic.version = 11 : i64} {
  func.func @mlp_kernel(%arg0: i32, %arg1: memref<8x784xbf16, #tpu.memory_space<vmem>>, %arg2: memref<784x128xbf16, #tpu.memory_space<vmem>>, %arg3: memref<1x128xf32, #tpu.memory_space<vmem>>, %arg4: memref<128x10xbf16, #tpu.memory_space<vmem>>, %arg5: memref<1x10xf32, #tpu.memory_space<vmem>>, %arg6: memref<8x10xf32, #tpu.memory_space<vmem>>) attributes {dimension_semantics = [#tpu.dimension_semantics<parallel>], iteration_bounds = array<i64: 1>, scalar_prefetch = 0 : i64, scratch_operands = 0 : i64, tpu.core_type = #tpu.core_type<tc>, window_params = [{transform_indices = @transform_0, window_bounds = array<i64: 8, 784>}, {pipeline_mode = #tpu.pipeline_mode<synchronous>, transform_indices = @transform_1, window_bounds = array<i64: 784, 128>}, {pipeline_mode = #tpu.pipeline_mode<synchronous>, transform_indices = @transform_2, window_bounds = array<i64: 1, 128>}, {pipeline_mode = #tpu.pipeline_mode<synchronous>, transform_indices = @transform_3, window_bounds = array<i64: 128, 10>}, {pipeline_mode = #tpu.pipeline_mode<synchronous>, transform_indices = @transform_4, window_bounds = array<i64: 1, 10>}, {transform_indices = @transform_5, window_bounds = array<i64: 8, 10>}]} {
    %c0 = arith.constant 0 : index
    %c0_0 = arith.constant 0 : index
    %0 = vector.load %arg1[%c0, %c0_0] : memref<8x784xbf16, #tpu.memory_space<vmem>>, vector<8x784xbf16>
    %c0_1 = arith.constant 0 : index
    %c0_2 = arith.constant 0 : index
    %1 = vector.load %arg2[%c0_1, %c0_2] : memref<784x128xbf16, #tpu.memory_space<vmem>>, vector<784x128xbf16>
    %cst = arith.constant dense<0.000000e+00> : vector<8x128xf32>
    %2 = tpu.matmul %0, %1, %cst {dimension_numbers = #tpu.dot_dimension_numbers<[1], [0], [0], [1], [0, 0, 1, 1], [], []>} : vector<8x784xbf16>, vector<784x128xbf16>, vector<8x128xf32> -> vector<8x128xf32>
    %c0_3 = arith.constant 0 : index
    %c0_4 = arith.constant 0 : index
    %3 = vector.load %arg3[%c0_3, %c0_4] : memref<1x128xf32, #tpu.memory_space<vmem>>, vector<1x128xf32>
    %4 = vector.broadcast %3 : vector<1x128xf32> to vector<8x128xf32>
    %5 = arith.addf %2, %4 : vector<8x128xf32>
    %cst_5 = arith.constant 0.000000e+00 : f32
    %6 = vector.broadcast %cst_5 : f32 to vector<8x128xf32>
    %7 = arith.maximumf %5, %6 : vector<8x128xf32>
    %8 = arith.truncf %7 : vector<8x128xf32> to vector<8x128xbf16>
    %c0_6 = arith.constant 0 : index
    %c0_7 = arith.constant 0 : index
    %9 = vector.load %arg4[%c0_6, %c0_7] : memref<128x10xbf16, #tpu.memory_space<vmem>>, vector<128x10xbf16>
    %cst_8 = arith.constant dense<0.000000e+00> : vector<8x10xf32>
    %10 = tpu.matmul %8, %9, %cst_8 {dimension_numbers = #tpu.dot_dimension_numbers<[1], [0], [0], [1], [0, 0, 1, 1], [], []>} : vector<8x128xbf16>, vector<128x10xbf16>, vector<8x10xf32> -> vector<8x10xf32>
    %c0_9 = arith.constant 0 : index
    %c0_10 = arith.constant 0 : index
    %11 = vector.load %arg5[%c0_9, %c0_10] : memref<1x10xf32, #tpu.memory_space<vmem>>, vector<1x10xf32>
    %12 = vector.broadcast %11 : vector<1x10xf32> to vector<8x10xf32>
    %13 = arith.addf %10, %12 : vector<8x10xf32>
    %c0_11 = arith.constant 0 : index
    %c0_12 = arith.constant 0 : index
    %14 = vector.load %arg6[%c0_11, %c0_12] : memref<8x10xf32, #tpu.memory_space<vmem>>, vector<8x10xf32>
    tpu.vector_store %arg6[%c0_11, %c0_12], %13 {strides = array<i32>} : memref<8x10xf32, #tpu.memory_space<vmem>>, vector<8x10xf32>,
    return
  }
  func.func @transform_0(%arg0: i32) -> (i32, i32) {
    %c0_i32 = arith.constant 0 : i32
    %c0_i32_0 = arith.constant 0 : i32
    return %arg0, %c0_i32 : i32, i32
  }
  func.func @transform_1(%arg0: i32) -> (i32, i32) {
    %c0_i32 = arith.constant 0 : i32
    %c0_i32_0 = arith.constant 0 : i32
    %c0_i32_1 = arith.constant 0 : i32
    return %c0_i32, %c0_i32_0 : i32, i32
  }
  func.func @transform_2(%arg0: i32) -> (i32, i32) {
    %c0_i32 = arith.constant 0 : i32
    %c0_i32_0 = arith.constant 0 : i32
    %c0_i32_1 = arith.constant 0 : i32
    return %c0_i32, %c0_i32_0 : i32, i32
  }
  func.func @transform_3(%arg0: i32) -> (i32, i32) {
    %c0_i32 = arith.constant 0 : i32
    %c0_i32_0 = arith.constant 0 : i32
    %c0_i32_1 = arith.constant 0 : i32
    return %c0_i32, %c0_i32_0 : i32, i32
  }
  func.func @transform_4(%arg0: i32) -> (i32, i32) {
    %c0_i32 = arith.constant 0 : i32
    %c0_i32_0 = arith.constant 0 : i32
    %c0_i32_1 = arith.constant 0 : i32
    return %c0_i32, %c0_i32_0 : i32, i32
  }
  func.func @transform_5(%arg0: i32) -> (i32, i32) {
    %c0_i32 = arith.constant 0 : i32
    %c0_i32_0 = arith.constant 0 : i32
    return %arg0, %c0_i32 : i32, i32
  }
}

</mosaic_0001>

<llo_original>
// kernel: tpu_custom_call.1
$region0: #{tpu_custom_call.1}
  #allocation0 [shape = 'u32[]', space=smem, size = 0x4, offset = 0x4, fixed_abs, tag = 'smem constant byte address 0x4 - core index']
  #allocation1 [shape = 'u32[72,128]{1,0:T(1,128)}', space=vmem, size = 0x9000, scoped, tag = 'internal scratch']
  %s0 = inlined_call_operand.vmem [shape: bf16[8,784], index: 0, kind: input, shape index: {}]
  %s1 = inlined_call_operand.hbm [shape: bf16[784,128], index: 1, kind: input, shape index: {}]
  %s2 = inlined_call_operand.vmem [shape: f32[1,128], index: 2, kind: input, shape index: {}]
  %s3 = inlined_call_operand.vmem [shape: bf16[128,10], index: 3, kind: input, shape index: {}]
  %s4 = inlined_call_operand.vmem [shape: f32[1,10], index: 4, kind: input, shape index: {}]
  %s5 = inlined_call_operand.hbm [shape: f32[8,10], index: 5, kind: output, shape index: {}]
  %s6 = sld [smem:[#allocation0]]
  $region34: #{tpu_custom_call.1} parent=0
    _
  %s8 = ssub.s32 1, %s6
  %s9 = scalar_select 0, %s8, %s6
  $region1: #{tpu_custom_call.1} parent=0
    #allocation2 [shape = 'u8[200704]{0}', space=vmem, size = 0x31000, scoped, tag = 'input window, operand 1, single buffered']
    #allocation3 [shape = 's32[1]{0}', space=sflag, size = 0x4, scoped, tag = 'scoped memory for tpu_custom_call.1']
    #allocation4 [shape = 's32[1]{0}', space=sflag, size = 0x4, scoped, tag = 'scoped memory for tpu_custom_call.1']
    #allocation5 [shape = 'u8[4096]{0}', space=vmem, size = 0x1000, scoped, tag = 'output window, operand 0, single buffered']
    %10 = vsyncpa [#allocation3], 0
    %11 = vsyncpa [#allocation4], 0
    // Predicated region
    $region2: #{tpu_custom_call.1} parent=1 // pred_check
      _
    $region3: #{tpu_custom_call.1} parent=1 // pred_check_branch
      %13 = sbr.rel (0) target = $region5
    $region4: #{tpu_custom_call.1} parent=1 // pred_region
      _
    $region5: #{tpu_custom_call.1} parent=1 // pred_fallthru
      _
    // Predicated region
    $region6: #{tpu_custom_call.1} parent=1 // pred_check
      _
    $region7: #{tpu_custom_call.1} parent=1 // pred_check_branch
      %15 = sbr.rel (0) target = $region9
    $region8: #{tpu_custom_call.1} parent=1 // pred_region
      %17 = vsyncadd [#allocation3], 0
      %s18 = sshll.u32 %s1, 4
      %s19 = int_to_ptr.hbm [resolvable:$true] %s18
      %s20 = sshll.u32 [#allocation2], 4
      %s21 = int_to_ptr.vmem [resolvable:$true] %s20
      %26 = dma.hbm_to_vmem [thread:$0]  %s19, 6272, %s21, [#allocation3], 64, 64, 4
    $region9: #{tpu_custom_call.1} parent=1 // pred_fallthru
      _
    // Predicated region
    $region10: #{tpu_custom_call.1} parent=1 // pred_check
      _
    $region11: #{tpu_custom_call.1} parent=1 // pred_check_branch
      %28 = sbr.rel (0) target = $region13
    $region12: #{tpu_custom_call.1} parent=1 // pred_region
      _
    $region13: #{tpu_custom_call.1} parent=1 // pred_fallthru
      _
    // Predicated region
    $region14: #{tpu_custom_call.1} parent=1 // pred_check
      _
    $region15: #{tpu_custom_call.1} parent=1 // pred_check_branch
      %30 = sbr.rel (0) target = $region17
    $region16: #{tpu_custom_call.1} parent=1 // pred_region
      _
    $region17: #{tpu_custom_call.1} parent=1 // pred_fallthru
      _
    // Predicated region
    $region18: #{tpu_custom_call.1} parent=1 // pred_check
      _
    $region19: #{tpu_custom_call.1} parent=1 // pred_check_branch
      %32 = sbr.rel (0) target = $region21
    $region20: #{tpu_custom_call.1} parent=1 // pred_region
      _
    $region21: #{tpu_custom_call.1} parent=1 // pred_fallthru
      _
    // Predicated region
    $region22: #{tpu_custom_call.1} parent=1 // pred_check
      _
    $region23: #{tpu_custom_call.1} parent=1 // pred_check_branch
      %34 = sbr.rel (0) target = $region25
    $region24: #{tpu_custom_call.1} parent=1 // pred_region
      %36 = dma.done [#allocation3], 6272
    $region25: #{tpu_custom_call.1} parent=1 // pred_fallthru
      _
    %v38 = vld [vmem:[%s0] sm:$0xff]
    %v39 = vld [vmem:[%s0 + $0x8] sm:$0xff]
    %v40 = vld [vmem:[%s0 + $0x10] sm:$0xff]
    %v41 = vld [vmem:[%s0 + $0x18] sm:$0xf]
    %v42 = vld [vmem:[#allocation2] sm:$0xf]
    %v43 = vld [vmem:[#allocation2 + $0x4] sm:$0xf]
    %v44 = vld [vmem:[#allocation2 + $0x8] sm:$0xf]
    %v45 = vld [vmem:[#allocation2 + $0xc] sm:$0xf]
    %v46 = vld [vmem:[#allocation2 + $0x10] sm:$0xf]
    %v47 = vld [vmem:[#allocation2 + $0x14] sm:$0xf]
    %v48 = vld [vmem:[#allocation2 + $0x18] sm:$0xf]
    %v49 = vld [vmem:[#allocation2 + $0x1c] sm:$0xf]
    %v50 = vld [vmem:[#allocation2 + $0x20] sm:$0xf]
    %v51 = vld [vmem:[#allocation2 + $0x24] sm:$0xf]
    %v52 = vld [vmem:[#allocation2 + $0x28] sm:$0xf]
    %v53 = vld [vmem:[#allocation2 + $0x2c] sm:$0xf]
    %v54 = vld [vmem:[#allocation2 + $0x30] sm:$0xf]
    %v55 = vld [vmem:[#allocation2 + $0x34] sm:$0xf]
    %v56 = vld [vmem:[#allocation2 + $0x38] sm:$0xf]
    %v57 = vld [vmem:[#allocation2 + $0x3c] sm:$0xf]
    %v58 = vld [vmem:[#allocation2 + $0x40] sm:$0xf]
    %v59 = vld [vmem:[#allocation2 + $0x44] sm:$0xf]
    %v60 = vld [vmem:[#allocation2 + $0x48] sm:$0xf]
    %v61 = vld [vmem:[#allocation2 + $0x4c] sm:$0xf]
    %v62 = vld [vmem:[#allocation2 + $0x50] sm:$0xf]
    %v63 = vld [vmem:[#allocation2 + $0x54] sm:$0xf]
    %v64 = vld [vmem:[#allocation2 + $0x58] sm:$0xf]
    %v65 = vld [vmem:[#allocation2 + $0x5c] sm:$0xf]
    %v66 = vld [vmem:[#allocation2 + $0x60] sm:$0xf]
    %v67 = vld [vmem:[#allocation2 + $0x64] sm:$0xf]
    %v68 = vld [vmem:[#allocation2 + $0x68] sm:$0xf]
    %v69 = vld [vmem:[#allocation2 + $0x6c] sm:$0xf]
    %v70 = vld [vmem:[#allocation2 + $0x70] sm:$0xf]
    %v71 = vld [vmem:[#allocation2 + $0x74] sm:$0xf]
    %v72 = vld [vmem:[#allocation2 + $0x78] sm:$0xf]
    %v73 = vld [vmem:[#allocation2 + $0x7c] sm:$0xf]
    %v74 = vld [vmem:[#allocation2 + $0x80] sm:$0xf]
    %v75 = vld [vmem:[#allocation2 + $0x84] sm:$0xf]
    %v76 = vld [vmem:[#allocation2 + $0x88] sm:$0xf]
    %v77 = vld [vmem:[#allocation2 + $0x8c] sm:$0xf]
    %v78 = vld [vmem:[#allocation2 + $0x90] sm:$0xf]
    %v79 = vld [vmem:[#allocation2 + $0x94] sm:$0xf]
    %v80 = vld [vmem:[#allocation2 + $0x98] sm:$0xf]
    %v81 = vld [vmem:[#allocation2 + $0x9c] sm:$0xf]
    %v82 = vld [vmem:[#allocation2 + $0xa0] sm:$0xf]
    %v83 = vld [vmem:[#allocation2 + $0xa4] sm:$0xf]
    %v84 = vld [vmem:[#allocation2 + $0xa8] sm:$0xf]
    %v85 = vld [vmem:[#allocation2 + $0xac] sm:$0xf]
    %v86 = vld [vmem:[#allocation2 + $0xb0] sm:$0xf]
    %v87 = vld [vmem:[#allocation2 + $0xb4] sm:$0xf]
    %v88 = vld [vmem:[#allocation2 + $0xb8] sm:$0xf]
    %v89 = vld [vmem:[#allocation2 + $0xbc] sm:$0xf]
    %v90 = vld [vmem:[#allocation2 + $0xc0] sm:$0xf]
    %v91 = vld [vmem:[#allocation2 + $0xc4] sm:$0xf]
    %v92 = vld [vmem:[#allocation2 + $0xc8] sm:$0xf]
    %v93 = vld [vmem:[#allocation2 + $0xcc] sm:$0xf]
    %v94 = vld [vmem:[#allocation2 + $0xd0] sm:$0xf]
    %v95 = vld [vmem:[#allocation2 + $0xd4] sm:$0xf]
    %v96 = vld [vmem:[#allocation2 + $0xd8] sm:$0xf]
    %v97 = vld [vmem:[#allocation2 + $0xdc] sm:$0xf]
    %v98 = vld [vmem:[#allocation2 + $0xe0] sm:$0xf]
    %v99 = vld [vmem:[#allocation2 + $0xe4] sm:$0xf]
    %v100 = vld [vmem:[#allocation2 + $0xe8] sm:$0xf]
    %v101 = vld [vmem:[#allocation2 + $0xec] sm:$0xf]
    %v102 = vld [vmem:[#allocation2 + $0xf0] sm:$0xf]
    %v103 = vld [vmem:[#allocation2 + $0xf4] sm:$0xf]
    %v104 = vld [vmem:[#allocation2 + $0xf8] sm:$0xf]
    %v105 = vld [vmem:[#allocation2 + $0xfc] sm:$0xf]
    %v106 = vld [vmem:[#allocation2 + $0x100] sm:$0xf]
    %v107 = vld [vmem:[#allocation2 + $0x104] sm:$0xf]
    %v108 = vld [vmem:[#allocation2 + $0x108] sm:$0xf]
    %v109 = vld [vmem:[#allocation2 + $0x10c] sm:$0xf]
    %v110 = vld [vmem:[#allocation2 + $0x110] sm:$0xf]
    %v111 = vld [vmem:[#allocation2 + $0x114] sm:$0xf]
    %v112 = vld [vmem:[#allocation2 + $0x118] sm:$0xf]
    %v113 = vld [vmem:[#allocation2 + $0x11c] sm:$0xf]
    %v114 = vld [vmem:[#allocation2 + $0x120] sm:$0xf]
    %v115 = vld [vmem:[#allocation2 + $0x124] sm:$0xf]
    %v116 = vld [vmem:[#allocation2 + $0x128] sm:$0xf]
    %v117 = vld [vmem:[#allocation2 + $0x12c] sm:$0xf]
    %v118 = vld [vmem:[#allocation2 + $0x130] sm:$0xf]
    %v119 = vld [vmem:[#allocation2 + $0x134] sm:$0xf]
    %v120 = vld [vmem:[#allocation2 + $0x138] sm:$0xf]
    %v121 = vld [vmem:[#allocation2 + $0x13c] sm:$0xf]
    %v122 = vld [vmem:[#allocation2 + $0x140] sm:$0xf]
    %v123 = vld [vmem:[#allocation2 + $0x144] sm:$0xf]
    %v124 = vld [vmem:[#allocation2 + $0x148] sm:$0xf]
    %v125 = vld [vmem:[#allocation2 + $0x14c] sm:$0xf]
    %v126 = vld [vmem:[#allocation2 + $0x150] sm:$0xf]
    %v127 = vld [vmem:[#allocation2 + $0x154] sm:$0xf]
    %v128 = vld [vmem:[#allocation2 + $0x158] sm:$0xf]
    %v129 = vld [vmem:[#allocation2 + $0x15c] sm:$0xf]
    %v130 = vld [vmem:[#allocation2 + $0x160] sm:$0xf]
    %v131 = vld [vmem:[#allocation2 + $0x164] sm:$0xf]
    %v132 = vld [vmem:[#allocation2 + $0x168] sm:$0xf]
    %v133 = vld [vmem:[#allocation2 + $0x16c] sm:$0xf]
    %v134 = vld [vmem:[#allocation2 + $0x170] sm:$0xf]
    %v135 = vld [vmem:[#allocation2 + $0x174] sm:$0xf]
    %v136 = vld [vmem:[#allocation2 + $0x178] sm:$0xf]
    %v137 = vld [vmem:[#allocation2 + $0x17c] sm:$0xf]
    %v138 = vld [vmem:[#allocation2 + $0x180] sm:$0xf]
    %v139 = vld [vmem:[#allocation2 + $0x184] sm:$0xf]
    %v140 = vld [vmem:[%s2] sm:$0x1]
    %v142 = vperm.slane %v140, 0
    %v148 = vunpack.c.l.b16 %v38
    %v149 = vunpack.c.h.b16 %v38
    %v150 = vunpack.c.l.b16 %v39
    %v151 = vunpack.c.h.b16 %v39
    %v152 = vunpack.c.l.b16 %v40
    %v153 = vunpack.c.h.b16 %v40
    %v154 = vunpack.c.l.b16 %v41
    %v155 = vpack.c.b16 %v148, %v148
    %v156 = vpack.c.b16 %v149, %v149
    %v157 = vpack.c.b16 %v150, %v150
    %v158 = vpack.c.b16 %v151, %v151
    %v159 = vpack.c.b16 %v152, %v152
    %v160 = vpack.c.b16 %v153, %v153
    %v161 = vpack.c.b16 %v154, %v154
    %v266 = vunpack.c.l.b16 %v42
    %v267 = vunpack.c.l.b16 %v43
    %v268 = vunpack.c.l.b16 %v44
    %v269 = vunpack.c.l.b16 %v45
    %v270 = vunpack.c.l.b16 %v46
    %v271 = vunpack.c.l.b16 %v47
    %v272 = vunpack.c.l.b16 %v48
    %v273 = vunpack.c.l.b16 %v49
    %v274 = vunpack.c.l.b16 %v50
    %v275 = vunpack.c.l.b16 %v51
    %v276 = vunpack.c.l.b16 %v52
    %v277 = vunpack.c.l.b16 %v53
    %v278 = vunpack.c.l.b16 %v54
    %v279 = vunpack.c.l.b16 %v55
    %v280 = vunpack.c.l.b16 %v56
    %v281 = vunpack.c.l.b16 %v57
    %v282 = vunpack.c.l.b16 %v58
    %v283 = vunpack.c.l.b16 %v59
    %v284 = vunpack.c.l.b16 %v60
    %v285 = vunpack.c.l.b16 %v61
    %v286 = vunpack.c.l.b16 %v62
    %v287 = vunpack.c.l.b16 %v63
    %v288 = vunpack.c.l.b16 %v64
    %v289 = vunpack.c.l.b16 %v65
    %v290 = vunpack.c.l.b16 %v66
    %v291 = vunpack.c.l.b16 %v67
    %v292 = vunpack.c.l.b16 %v68
    %v293 = vunpack.c.l.b16 %v69
    %v294 = vunpack.c.l.b16 %v70
    %v295 = vunpack.c.l.b16 %v71
    %v296 = vunpack.c.l.b16 %v72
    %v297 = vunpack.c.l.b16 %v73
    %v298 = vunpack.c.l.b16 %v74
    %v299 = vunpack.c.l.b16 %v75
    %v300 = vunpack.c.l.b16 %v76
    %v301 = vunpack.c.l.b16 %v77
    %v302 = vunpack.c.l.b16 %v78
    %v303 = vunpack.c.l.b16 %v79
    %v304 = vunpack.c.l.b16 %v80
    %v305 = vunpack.c.l.b16 %v81
    %v306 = vunpack.c.l.b16 %v82
    %v307 = vunpack.c.l.b16 %v83
    %v308 = vunpack.c.l.b16 %v84
    %v309 = vunpack.c.l.b16 %v85
    %v310 = vunpack.c.l.b16 %v86
    %v311 = vunpack.c.l.b16 %v87
    %v312 = vunpack.c.l.b16 %v88
    %v313 = vunpack.c.l.b16 %v89
    %v314 = vunpack.c.l.b16 %v90
    %v315 = vunpack.c.l.b16 %v91
    %v316 = vunpack.c.l.b16 %v92
    %v317 = vunpack.c.l.b16 %v93
    %v318 = vunpack.c.l.b16 %v94
    %v319 = vunpack.c.l.b16 %v95
    %v320 = vunpack.c.l.b16 %v96
    %v321 = vunpack.c.l.b16 %v97
    %v322 = vunpack.c.l.b16 %v98
    %v323 = vunpack.c.l.b16 %v99
    %v324 = vunpack.c.l.b16 %v100
    %v325 = vunpack.c.l.b16 %v101
    %v326 = vunpack.c.l.b16 %v102
    %v327 = vunpack.c.l.b16 %v103
    %v328 = vunpack.c.l.b16 %v104
    %v329 = vunpack.c.l.b16 %v105
    %v330 = vunpack.c.l.b16 %v106
    %v331 = vunpack.c.l.b16 %v107
    %v332 = vunpack.c.l.b16 %v108
    %v333 = vunpack.c.l.b16 %v109
    %v334 = vunpack.c.l.b16 %v110
    %v335 = vunpack.c.l.b16 %v111
    %v336 = vunpack.c.l.b16 %v112
    %v337 = vunpack.c.l.b16 %v113
    %v338 = vunpack.c.l.b16 %v114
    %v339 = vunpack.c.l.b16 %v115
    %v340 = vunpack.c.l.b16 %v116
    %v341 = vunpack.c.l.b16 %v117
    %v342 = vunpack.c.l.b16 %v118
    %v343 = vunpack.c.l.b16 %v119
    %v344 = vunpack.c.l.b16 %v120
    %v345 = vunpack.c.l.b16 %v121
    %v346 = vunpack.c.l.b16 %v122
    %v347 = vunpack.c.l.b16 %v123
    %v348 = vunpack.c.l.b16 %v124
    %v349 = vunpack.c.l.b16 %v125
    %v350 = vunpack.c.l.b16 %v126
    %v351 = vunpack.c.l.b16 %v127
    %v352 = vunpack.c.l.b16 %v128
    %v353 = vunpack.c.l.b16 %v129
    %v354 = vunpack.c.l.b16 %v130
    %v355 = vunpack.c.l.b16 %v131
    %v356 = vunpack.c.l.b16 %v132
    %v357 = vunpack.c.l.b16 %v133
    %v358 = vunpack.c.l.b16 %v134
    %v359 = vunpack.c.l.b16 %v135
    %v360 = vunpack.c.l.b16 %v136
    %v361 = vunpack.c.l.b16 %v137
    %v362 = vunpack.c.l.b16 %v138
    %v363 = vunpack.c.l.b16 %v139
    %v364 = vpack.c.b16 %v267, %v266
    %v365 = vpack.c.b16 %v269, %v268
    %v366 = vpack.c.b16 %v271, %v270
    %v367 = vpack.c.b16 %v273, %v272
    %v368 = vpack.c.b16 %v275, %v274
    %v369 = vpack.c.b16 %v277, %v276
    %v370 = vpack.c.b16 %v279, %v278
    %v371 = vpack.c.b16 %v281, %v280
    %v372 = vpack.c.b16 %v283, %v282
    %v373 = vpack.c.b16 %v285, %v284
    %v374 = vpack.c.b16 %v287, %v286
    %v375 = vpack.c.b16 %v289, %v288
    %v376 = vpack.c.b16 %v291, %v290
    %v377 = vpack.c.b16 %v293, %v292
    %v378 = vpack.c.b16 %v295, %v294
    %v379 = vpack.c.b16 %v297, %v296
    %v380 = vpack.c.b16 %v299, %v298
    %v381 = vpack.c.b16 %v301, %v300
    %v382 = vpack.c.b16 %v303, %v302
    %v383 = vpack.c.b16 %v305, %v304
    %v384 = vpack.c.b16 %v307, %v306
    %v385 = vpack.c.b16 %v309, %v308
    %v386 = vpack.c.b16 %v311, %v310
    %v387 = vpack.c.b16 %v313, %v312
    %v388 = vpack.c.b16 %v315, %v314
    %v389 = vpack.c.b16 %v317, %v316
    %v390 = vpack.c.b16 %v319, %v318
    %v391 = vpack.c.b16 %v321, %v320
    %v392 = vpack.c.b16 %v323, %v322
    %v393 = vpack.c.b16 %v325, %v324
    %v394 = vpack.c.b16 %v327, %v326
    %v395 = vpack.c.b16 %v329, %v328
    %v396 = vpack.c.b16 %v331, %v330
    %v397 = vpack.c.b16 %v333, %v332
    %v398 = vpack.c.b16 %v335, %v334
    %v399 = vpack.c.b16 %v337, %v336
    %v400 = vpack.c.b16 %v339, %v338
    %v401 = vpack.c.b16 %v341, %v340
    %v402 = vpack.c.b16 %v343, %v342
    %v403 = vpack.c.b16 %v345, %v344
    %v404 = vpack.c.b16 %v347, %v346
    %v405 = vpack.c.b16 %v349, %v348
    %v406 = vpack.c.b16 %v351, %v350
    %v407 = vpack.c.b16 %v353, %v352
    %v408 = vpack.c.b16 %v355, %v354
    %v409 = vpack.c.b16 %v357, %v356
    %v410 = vpack.c.b16 %v359, %v358
    %v411 = vpack.c.b16 %v361, %v360
    %v412 = vpack.c.b16 %v363, %v362
    %vm462 = vcmask 130048
    %v464 = vsel %vm462, %v161, 0
    %466 = vmatpush.bf16.msra.mxu0 %v371
    %467 = vmatpush.bf16.msra.mxu0 %v370
    %468 = vmatpush.bf16.msra.mxu0 %v369
    %469 = vmatpush.bf16.msra.mxu0 %v368
    %470 = vmatpush.bf16.msra.mxu0 %v367
    %471 = vmatpush.bf16.msra.mxu0 %v366
    %472 = vmatpush.bf16.msra.mxu0 %v365
    %473 = vmatpush.bf16.msra.mxu0 %v364
    %474 = vmatmul.bf16.gmra.mxu0 %v155
    %v475 = vpop.f32.mrf.mxu0
    %v476 = vadd.f32 %v142, %v475
    %v477 = vpop.f32.mrf.mxu0
    %478 = vdwg.mxu0
    %479 = vmatpush.bf16.msra.mxu0 %v379
    %480 = vmatpush.bf16.msra.mxu0 %v378
    %481 = vmatpush.bf16.msra.mxu0 %v377
    %482 = vmatpush.bf16.msra.mxu0 %v376
    %483 = vmatpush.bf16.msra.mxu0 %v375
    %484 = vmatpush.bf16.msra.mxu0 %v374
    %485 = vmatpush.bf16.msra.mxu0 %v373
    %486 = vmatpush.bf16.msra.mxu0 %v372
    %487 = vmatmul.bf16.gmra.mxu0 %v156
    %v488 = vpop.f32.mrf.mxu0
    %v489 = vadd.f32 %v476, %v488
    %v490 = vpop.f32.mrf.mxu0
    %491 = vdwg.mxu0
    %492 = vmatpush.bf16.msra.mxu0 %v387
    %493 = vmatpush.bf16.msra.mxu0 %v386
    %494 = vmatpush.bf16.msra.mxu0 %v385
    %495 = vmatpush.bf16.msra.mxu0 %v384
    %496 = vmatpush.bf16.msra.mxu0 %v383
    %497 = vmatpush.bf16.msra.mxu0 %v382
    %498 = vmatpush.bf16.msra.mxu0 %v381
    %499 = vmatpush.bf16.msra.mxu0 %v380
    %500 = vmatmul.bf16.gmra.mxu0 %v157
    %v501 = vpop.f32.mrf.mxu0
    %v502 = vadd.f32 %v489, %v501
    %v503 = vpop.f32.mrf.mxu0
    %504 = vdwg.mxu0
    %505 = vmatpush.bf16.msra.mxu0 %v395
    %506 = vmatpush.bf16.msra.mxu0 %v394
    %507 = vmatpush.bf16.msra.mxu0 %v393
    %508 = vmatpush.bf16.msra.mxu0 %v392
    %509 = vmatpush.bf16.msra.mxu0 %v391
    %510 = vmatpush.bf16.msra.mxu0 %v390
    %511 = vmatpush.bf16.msra.mxu0 %v389
    %512 = vmatpush.bf16.msra.mxu0 %v388
    %513 = vmatmul.bf16.gmra.mxu0 %v158
    %v514 = vpop.f32.mrf.mxu0
    %v515 = vadd.f32 %v502, %v514
    %v516 = vpop.f32.mrf.mxu0
    %517 = vdwg.mxu0
    %518 = vmatpush.bf16.msra.mxu0 %v403
    %519 = vmatpush.bf16.msra.mxu0 %v402
    %520 = vmatpush.bf16.msra.mxu0 %v401
    %521 = vmatpush.bf16.msra.mxu0 %v400
    %522 = vmatpush.bf16.msra.mxu0 %v399
    %523 = vmatpush.bf16.msra.mxu0 %v398
    %524 = vmatpush.bf16.msra.mxu0 %v397
    %525 = vmatpush.bf16.msra.mxu0 %v396
    %526 = vmatmul.bf16.gmra.mxu0 %v159
    %v527 = vpop.f32.mrf.mxu0
    %v528 = vadd.f32 %v515, %v527
    %v529 = vpop.f32.mrf.mxu0
    %530 = vdwg.mxu0
    %531 = vmatpush.bf16.msra.mxu0 %v411
    %532 = vmatpush.bf16.msra.mxu0 %v410
    %533 = vmatpush.bf16.msra.mxu0 %v409
    %534 = vmatpush.bf16.msra.mxu0 %v408
    %535 = vmatpush.bf16.msra.mxu0 %v407
    %536 = vmatpush.bf16.msra.mxu0 %v406
    %537 = vmatpush.bf16.msra.mxu0 %v405
    %538 = vmatpush.bf16.msra.mxu0 %v404
    %539 = vmatmul.bf16.gmra.mxu0 %v160
    %v540 = vpop.f32.mrf.mxu0
    %v541 = vadd.f32 %v528, %v540
    %v542 = vpop.f32.mrf.mxu0
    %543 = vdwg.mxu0
    %544 = vmatpush.bf16.msra.mxu0 0
    %545 = vmatpush.bf16.msra.mxu0 0
    %546 = vmatpush.bf16.msra.mxu0 0
    %547 = vmatpush.bf16.msra.mxu0 0
    %548 = vmatpush.bf16.msra.mxu0 0
    %549 = vmatpush.bf16.msra.mxu0 0
    %550 = vmatpush.bf16.msra.mxu0 0
    %551 = vmatpush.bf16.msra.mxu0 %v412
    %552 = vmatmul.bf16.gmra.mxu0 %v464
    %v553 = vpop.f32.mrf.mxu0
    %v554 = vadd.f32 %v541, %v553
    %v555 = vpop.f32.mrf.mxu0
    %556 = vdwg.mxu0
    %v557 = vmax.f32 %v554, 0.0
    %v558 = vpack.c.bf16 %v557, %v557
    %v559 = vld [vmem:[%s3] sm:$0xf]
    %v560 = vld [vmem:[%s3 + $0x4] sm:$0xf]
    %v561 = vld [vmem:[%s3 + $0x8] sm:$0xf]
    %v562 = vld [vmem:[%s3 + $0xc] sm:$0xf]
    %v563 = vld [vmem:[%s3 + $0x10] sm:$0xf]
    %v564 = vld [vmem:[%s3 + $0x14] sm:$0xf]
    %v565 = vld [vmem:[%s3 + $0x18] sm:$0xf]
    %v566 = vld [vmem:[%s3 + $0x1c] sm:$0xf]
    %v567 = vld [vmem:[%s3 + $0x20] sm:$0xf]
    %v568 = vld [vmem:[%s3 + $0x24] sm:$0xf]
    %v569 = vld [vmem:[%s3 + $0x28] sm:$0xf]
    %v570 = vld [vmem:[%s3 + $0x2c] sm:$0xf]
    %v571 = vld [vmem:[%s3 + $0x30] sm:$0xf]
    %v572 = vld [vmem:[%s3 + $0x34] sm:$0xf]
    %v573 = vld [vmem:[%s3 + $0x38] sm:$0xf]
    %v574 = vld [vmem:[%s3 + $0x3c] sm:$0xf]
    %v575 = vld [vmem:[%s4] sm:$0x1]
    %v577 = vperm.slane %v575, 0
    %v595 = vunpack.c.l.b16 %v559
    %v596 = vunpack.c.l.b16 %v560
    %v597 = vunpack.c.l.b16 %v561
    %v598 = vunpack.c.l.b16 %v562
    %v599 = vunpack.c.l.b16 %v563
    %v600 = vunpack.c.l.b16 %v564
    %v601 = vunpack.c.l.b16 %v565
    %v602 = vunpack.c.l.b16 %v566
    %v603 = vunpack.c.l.b16 %v567
    %v604 = vunpack.c.l.b16 %v568
    %v605 = vunpack.c.l.b16 %v569
    %v606 = vunpack.c.l.b16 %v570
    %v607 = vunpack.c.l.b16 %v571
    %v608 = vunpack.c.l.b16 %v572
    %v609 = vunpack.c.l.b16 %v573
    %v610 = vunpack.c.l.b16 %v574
    %v611 = vpack.c.b16 %v596, %v595
    %v612 = vpack.c.b16 %v598, %v597
    %v613 = vpack.c.b16 %v600, %v599
    %v614 = vpack.c.b16 %v602, %v601
    %v615 = vpack.c.b16 %v604, %v603
    %v616 = vpack.c.b16 %v606, %v605
    %v617 = vpack.c.b16 %v608, %v607
    %v618 = vpack.c.b16 %v610, %v609
    %627 = vmatpush.bf16.msra.mxu0 %v618
    %628 = vmatpush.bf16.msra.mxu0 %v617
    %629 = vmatpush.bf16.msra.mxu0 %v616
    %630 = vmatpush.bf16.msra.mxu0 %v615
    %631 = vmatpush.bf16.msra.mxu0 %v614
    %632 = vmatpush.bf16.msra.mxu0 %v613
    %633 = vmatpush.bf16.msra.mxu0 %v612
    %634 = vmatpush.bf16.msra.mxu0 %v611
    %635 = vmatmul.bf16.gmra.mxu0 %v558
    %v636 = vpop.f32.mrf.mxu0
    %v637 = vadd.f32 %v577, %v636
    %v638 = vpop.f32.mrf.mxu0
    %639 = vdwg.mxu0
    %vm640 = vcmask 80896
    %641 = vst.msk [vmem:[#allocation5] sm:$0xff] %vm640, %v637
    // Predicated region
    $region26: #{tpu_custom_call.1} parent=1 // pred_check
      _
    $region27: #{tpu_custom_call.1} parent=1 // pred_check_branch
      %643 = sbr.rel (0) target = $region29
    $region28: #{tpu_custom_call.1} parent=1 // pred_region
      %645 = vsyncadd [#allocation4], 0
      %s647 = sshll.u32 [#allocation5], 4
      %s648 = int_to_ptr.vmem [resolvable:$true] %s647
      %s649 = sshll.u32 %s5, 4
      %s650 = int_to_ptr.hbm [resolvable:$true] %s649
      %652 = dma.vmem_to_hbm [thread:$0]  %s648, 128, %s650, [#allocation4]
    $region29: #{tpu_custom_call.1} parent=1 // pred_fallthru
      _
    // Predicated region
    $region30: #{tpu_custom_call.1} parent=1 // pred_check
      _
    $region31: #{tpu_custom_call.1} parent=1 // pred_check_branch
      %654 = sbr.rel (0) target = $region33
    $region32: #{tpu_custom_call.1} parent=1 // pred_region
      %656 = dma.done [#allocation4], 128
    $region33: #{tpu_custom_call.1} parent=1 // pred_fallthru
      _
    %657 = vsyncpa [#allocation3], 1
    %658 = vsyncpa [#allocation4], 1

</llo_original>
